<compile_context>
chip_gen: v7x
topology: tpu7x:2x2x1
jax: 0.10.0
libtpu: 0.0.40
codegen_flags: <defaults>
</compile_context>

<pallas_src>
import functools

import jax
import jax.numpy as jnp
from jax import lax
from jax.experimental import pallas as pl
from jax.experimental.pallas import tpu as pltpu

KERNEL_SIZE = 7
PAD = KERNEL_SIZE // 2  # 3


def _round_up(a, b):
    return (a + b - 1) // b * b


def _vmem_capacity_bytes():
    try:
        return int(pltpu.get_tpu_info().vmem_capacity_bytes)
    except Exception:
        return 64 << 20  # conservative (v7x-sized) fallback


def _choose_hw_tile(hw, max_lanes=2048):
    """Largest multiple-of-128 divisor of hw not exceeding max_lanes (else hw)."""
    if hw % 128 != 0:
        return hw  # block must equal the full dim when it is not 128-divisible
    best = 128
    d = 128
    while d <= min(hw, max_lanes):
        if hw % d == 0:
            best = d
        d += 128
    return best


def _choose_c_tile(C, hw_t, itemsize, target_block_bytes, max_ct=128):
    if C % 8 != 0:
        # TODO(synk): very large C not divisible by 8 would need a masked last
        #             chunk; fall back to a single (full-C) tile.
        return C
    budget = max(8, (target_block_bytes // max(1, hw_t * itemsize)) // 8 * 8)
    cap = min(C, max_ct, budget)
    best = 8
    for d in range(8, cap + 1, 8):
        if C % d == 0:
            best = d
    return best


def _choose_batch_tile(N, per_batch_bytes, target_block_bytes, other_steps, max_bt=16):
    divisors = [d for d in range(1, N + 1) if N % d == 0]
    fits = [d for d in divisors
            if d <= max_bt and d * per_batch_bytes <= target_block_bytes] or [1]
    # Prefer >=4 total grid steps (>=2 per v7x TensorCore), then >=2, then any.
    for min_steps in (4, 2, 1):
        pool = [d for d in fits if (N // d) * other_steps >= min_steps]
        if pool:
            return max(pool)
    return 1


# ---------------------------------------------------------------------------
# Pass 1: lane-dense channel max / mean over (N, C, H*W)
# ---------------------------------------------------------------------------
def _reduce_kernel(x_ref, o_ref, *, inv_c):
    """x_ref: (bt, ct, hw_t) input dtype; o_ref: (bt, 2, hw_t) f32, resident
    across the innermost C grid axis (ch 0 = running max, ch 1 = running sum,
    scaled to the mean on the last C step)."""
    ci = pl.program_id(2)
    ct = x_ref.shape[1]

    blk_max = None
    blk_sum = None
    for c0 in range(0, ct, 8):                      # aligned full-sublane groups
        g = min(8, ct - c0)
        xg = x_ref[:, c0:c0 + g, :]
        gmax = jnp.max(xg, axis=1)                  # input dtype (matches reference)
        gsum = jnp.sum(xg.astype(jnp.float32), axis=1)
        blk_max = gmax if blk_max is None else jnp.maximum(blk_max, gmax)
        blk_sum = gsum if blk_sum is None else blk_sum + gsum
    blk_max = blk_max.astype(jnp.float32)

    @pl.when(ci == 0)
    def _():
        o_ref[:, 0, :] = blk_max
        o_ref[:, 1, :] = blk_sum

    @pl.when(ci > 0)
    def _():
        o_ref[:, 0, :] = jnp.maximum(o_ref[:, 0, :], blk_max)
        o_ref[:, 1, :] = o_ref[:, 1, :] + blk_sum

    @pl.when(ci == pl.num_programs(2) - 1)
    def _():
        o_ref[:, 1, :] = o_ref[:, 1, :] * inv_c


# ---------------------------------------------------------------------------
# Pass 2: tiny 7x7 conv (2->1 ch) + bias + sigmoid on pre-padded maps
# ---------------------------------------------------------------------------
def _conv_kernel(m_ref, w_ref, b_ref, o_ref, *, H, W):
    """m_ref: (bt, 2, H+6, W+6) f32 zero-padded max/avg maps (VMEM)
       w_ref: (2*7*7,) f32 SMEM, [in_ch, ky, kx] row-major; b_ref: (1,) f32 SMEM
       o_ref: (bt, 1, H, W) output dtype."""
    K = KERNEL_SIZE
    bt = m_ref.shape[0]
    w = [w_ref[i] for i in range(2 * K * K)]   # hoisted: read SMEM weights once
    bias = b_ref[0]
    for b in range(bt):
        acc = None
        for ch in range(2):
            p = m_ref[b, ch, :, :]             # value in vregs; no scratch staging
            for ky in range(K):
                for kx in range(K):
                    tap = w[ch * K * K + ky * K + kx] * p[ky:ky + H, kx:kx + W]
                    acc = tap if acc is None else acc + tap
        # TODO(synk): for very small H, pack both maps / several batch elements
        #             along the sublane axis of one accumulator to fill vregs.
        o_ref[b, 0, :, :] = jax.nn.sigmoid(acc + bias).astype(o_ref.dtype)


def spatial_attention(x, weight, bias):
    """x: (N,C,H,W); weight: (1,2,7,7); bias: (1,). Returns (N,1,H,W) in x.dtype."""
    N, C, H, W = x.shape
    HW = H * W
    itemsize = jnp.dtype(x.dtype).itemsize

    w_flat = weight.reshape(-1).astype(jnp.float32)   # [in_ch, ky, kx] row-major
    b_vec = bias.reshape(-1).astype(jnp.float32)

    # ---- generation-aware budgets ------------------------------------------
    vmem_cap = _vmem_capacity_bytes()                 # 64 MiB v7x, 128 MiB v5e/v6e
    target_block = min(16 << 20, max(4 << 20, vmem_cap // 8))

    # ---- pass 1: lane-dense channel max / mean -------------------------------
    hw_t = _choose_hw_tile(HW)
    ct = _choose_c_tile(C, hw_t, itemsize, target_block)
    in_per_batch = _round_up(ct, 8) * hw_t * itemsize
    out_per_batch = _round_up(2, 8) * hw_t * 4
    other_steps = (HW // hw_t) * (C // ct)
    bt = _choose_batch_tile(N, in_per_batch + out_per_batch, target_block, other_steps)

    in_block = bt * in_per_batch
    out_block = bt * out_per_batch
    vmem_limit1 = int(min(max(2 * (in_block + out_block) + (2 << 20), 16 << 20),
                          (vmem_cap * 3) // 4))

    x_flat = x.reshape(N, C, HW)                      # free view of contiguous NCHW
    inter = pl.pallas_call(
        functools.partial(_reduce_kernel, inv_c=1.0 / C),
        out_shape=jax.ShapeDtypeStruct((N, 2, HW), jnp.float32),
        grid_spec=pltpu.PrefetchScalarGridSpec(
            num_scalar_prefetch=0,
            grid=(N // bt, HW // hw_t, C // ct),
            in_specs=[pl.BlockSpec((bt, ct, hw_t), lambda n, s, c: (n, c, s))],
            out_specs=pl.BlockSpec((bt, 2, hw_t), lambda n, s, c: (n, 0, s)),
        ),
        compiler_params=pltpu.CompilerParams(
            dimension_semantics=("parallel", "parallel", "arbitrary"),
            vmem_limit_bytes=vmem_limit1,
        ),
        cost_estimate=pl.CostEstimate(
            flops=int(2 * N * C * HW),
            transcendentals=0,
            bytes_accessed=int(N * C * HW * itemsize + N * 2 * HW * 4),
        ),
    )(x_flat)

    # ---- pass 2: 7x7 conv + sigmoid on the tiny (N,2,H,W) maps ---------------
    Hp, Wp = H + 2 * PAD, W + 2 * PAD
    maps = inter.reshape(N, 2, H, W)                  # free view
    maps_padded = jnp.pad(maps, ((0, 0), (0, 0), (PAD, PAD), (PAD, PAD)))

    out = pl.pallas_call(
        functools.partial(_conv_kernel, H=H, W=W),
        out_shape=jax.ShapeDtypeStruct((N, 1, H, W), x.dtype),
        grid_spec=pltpu.PrefetchScalarGridSpec(
            num_scalar_prefetch=0,
            grid=(N,),
            in_specs=[
                pl.BlockSpec((1, 2, Hp, Wp), lambda n: (n, 0, 0, 0)),
                pl.BlockSpec(memory_space=pltpu.MemorySpace.SMEM),
                pl.BlockSpec(memory_space=pltpu.MemorySpace.SMEM),
            ],
            out_specs=pl.BlockSpec((1, 1, H, W), lambda n: (n, 0, 0, 0)),
        ),
        compiler_params=pltpu.CompilerParams(
            dimension_semantics=("parallel",),
        ),
        cost_estimate=pl.CostEstimate(
            flops=int(N * HW * (4 * KERNEL_SIZE * KERNEL_SIZE + 4)),
            transcendentals=int(N * HW),
            bytes_accessed=int(N * 2 * Hp * Wp * 4 + N * HW * itemsize),
        ),
    )(maps_padded, w_flat, b_vec)
    # TODO(synk): pass-2 output store is not lane-dense (W < 128); it is a
    #             negligible fraction of total HBM traffic so left as-is.
    return out


def spatial_attention_ref(x, weight, bias):
    """Pure-JAX reference mirroring the PyTorch forward."""
    max_r = jnp.max(x, axis=1, keepdims=True)
    avg_r = jnp.mean(x, axis=1, keepdims=True)
    result = jnp.concatenate([max_r, avg_r], axis=1)          # (N,2,H,W)
    out = lax.conv_general_dilated(
        result.astype(jnp.float32), weight.astype(jnp.float32),
        window_strides=(1, 1), padding=((PAD, PAD), (PAD, PAD)),
        dimension_numbers=("NCHW", "OIHW", "NCHW"))
    return jax.nn.sigmoid(out + bias.reshape(1, 1, 1, 1)).astype(x.dtype)


if __name__ == "__main__":
    key = jax.random.PRNGKey(0)
    k_x, k_w, k_b = jax.random.split(key, 3)

    N, C, H, W = 2, 4, 16, 16
    x = jax.random.normal(k_x, (N, C, H, W), dtype=jnp.float32)

    # Conv2d(2, 1, kernel_size=7, padding=3)-shaped parameters.
    fan_in = 2 * KERNEL_SIZE * KERNEL_SIZE
    bound = 1.0 / (fan_in ** 0.5)
    weight = jax.random.uniform(k_w, (1, 2, KERNEL_SIZE, KERNEL_SIZE),
                                minval=-bound, maxval=bound, dtype=jnp.float32)
    bias = jax.random.uniform(k_b, (1,), minval=-bound, maxval=bound,
                              dtype=jnp.float32)

    out = jax.block_until_ready(spatial_attention(x, weight, bias))
    ref = jax.block_until_ready(spatial_attention_ref(x, weight, bias))

    assert out.shape == (N, 1, H, W)
    assert jnp.allclose(out, ref, atol=1e-5, rtol=1e-5), \
        f"max abs err {jnp.max(jnp.abs(out - ref))}"
    print("KERNEL_OK")
</pallas_src>

<mosaic_0001>
module attributes {stable_mosaic.version = 11 : i64} {
  func.func @_reduce_kernel(%arg0: i32, %arg1: i32, %arg2: i32, %arg3: memref<1x4x256xf32, #tpu.memory_space<vmem>>, %arg4: memref<1x2x256xf32, #tpu.memory_space<vmem>>) attributes {dimension_semantics = [#tpu.dimension_semantics<parallel>, #tpu.dimension_semantics<parallel>, #tpu.dimension_semantics<arbitrary>], iteration_bounds = array<i64: 2, 1, 1>, scalar_prefetch = 0 : i64, scratch_operands = 0 : i64, tpu.core_type = #tpu.core_type<tc>, window_params = [{transform_indices = @transform_0, window_bounds = array<i64: 1, 4, 256>}, {transform_indices = @transform_1, window_bounds = array<i64: 1, 2, 256>}]} {
    %c0 = arith.constant 0 : index
    %c0_0 = arith.constant 0 : index
    %c0_1 = arith.constant 0 : index
    %0 = vector.load %arg3[%c0, %c0_0, %c0_1] : memref<1x4x256xf32, #tpu.memory_space<vmem>>, vector<1x4x256xf32>
    %cst = arith.constant dense<0xFF800000> : vector<1x256xf32>
    %1 = vector.multi_reduction <maximumf>, %0, %cst [1] : vector<1x4x256xf32> to vector<1x256xf32>
    %cst_2 = arith.constant dense<0.000000e+00> : vector<1x256xf32>
    %2 = vector.multi_reduction <add>, %0, %cst_2 [1] : vector<1x4x256xf32> to vector<1x256xf32>
    %c0_i32 = arith.constant 0 : i32
    %3 = arith.cmpi eq, %arg2, %c0_i32 : i32
    %4 = arith.extui %3 : i1 to i32
    %c0_i32_3 = arith.constant 0 : i32
    %5 = arith.cmpi ne, %4, %c0_i32_3 : i32
    scf.if %5 {
      %c0_8 = arith.constant 0 : index
      %c0_9 = arith.constant 0 : index
      %c0_10 = arith.constant 0 : index
      %12 = vector.load %arg4[%c0_8, %c0_9, %c0_10] : memref<1x2x256xf32, #tpu.memory_space<vmem>>, vector<1x1x256xf32>
      %13 = vector.shape_cast %12 : vector<1x1x256xf32> to vector<1x256xf32>
      %14 = vector.shape_cast %1 : vector<1x256xf32> to vector<1x1x256xf32>
      tpu.vector_store %arg4[%c0_8, %c0_9, %c0_10], %14 {strides = array<i32>} : memref<1x2x256xf32, #tpu.memory_space<vmem>>, vector<1x1x256xf32>,
      %c0_11 = arith.constant 0 : index
      %c1 = arith.constant 1 : index
      %c0_12 = arith.constant 0 : index
      %15 = vector.load %arg4[%c0_11, %c1, %c0_12] : memref<1x2x256xf32, #tpu.memory_space<vmem>>, vector<1x1x256xf32>
      %16 = vector.shape_cast %15 : vector<1x1x256xf32> to vector<1x256xf32>
      %17 = vector.shape_cast %2 : vector<1x256xf32> to vector<1x1x256xf32>
      tpu.vector_store %arg4[%c0_11, %c1, %c0_12], %17 {strides = array<i32>} : memref<1x2x256xf32, #tpu.memory_space<vmem>>, vector<1x1x256xf32>,
    } else {
    }
    %c0_i32_4 = arith.constant 0 : i32
    %6 = arith.cmpi sgt, %arg2, %c0_i32_4 : i32
    %7 = arith.extui %6 : i1 to i32
    %c0_i32_5 = arith.constant 0 : i32
    %8 = arith.cmpi ne, %7, %c0_i32_5 : i32
    scf.if %8 {
      %c0_8 = arith.constant 0 : index
      %c0_9 = arith.constant 0 : index
      %c0_10 = arith.constant 0 : index
      %12 = vector.load %arg4[%c0_8, %c0_9, %c0_10] : memref<1x2x256xf32, #tpu.memory_space<vmem>>, vector<1x1x256xf32>
      %13 = vector.shape_cast %12 : vector<1x1x256xf32> to vector<1x256xf32>
      %14 = arith.maximumf %13, %1 : vector<1x256xf32>
      %c0_11 = arith.constant 0 : index
      %c0_12 = arith.constant 0 : index
      %c0_13 = arith.constant 0 : index
      %15 = vector.load %arg4[%c0_11, %c0_12, %c0_13] : memref<1x2x256xf32, #tpu.memory_space<vmem>>, vector<1x1x256xf32>
      %16 = vector.shape_cast %15 : vector<1x1x256xf32> to vector<1x256xf32>
      %17 = vector.shape_cast %14 : vector<1x256xf32> to vector<1x1x256xf32>
      tpu.vector_store %arg4[%c0_11, %c0_12, %c0_13], %17 {strides = array<i32>} : memref<1x2x256xf32, #tpu.memory_space<vmem>>, vector<1x1x256xf32>,
      %c0_14 = arith.constant 0 : index
      %c1 = arith.constant 1 : index
      %c0_15 = arith.constant 0 : index
      %18 = vector.load %arg4[%c0_14, %c1, %c0_15] : memref<1x2x256xf32, #tpu.memory_space<vmem>>, vector<1x1x256xf32>
      %19 = vector.shape_cast %18 : vector<1x1x256xf32> to vector<1x256xf32>
      %20 = arith.addf %19, %2 : vector<1x256xf32>
      %c0_16 = arith.constant 0 : index
      %c1_17 = arith.constant 1 : index
      %c0_18 = arith.constant 0 : index
      %21 = vector.load %arg4[%c0_16, %c1_17, %c0_18] : memref<1x2x256xf32, #tpu.memory_space<vmem>>, vector<1x1x256xf32>
      %22 = vector.shape_cast %21 : vector<1x1x256xf32> to vector<1x256xf32>
      %23 = vector.shape_cast %20 : vector<1x256xf32> to vector<1x1x256xf32>
      tpu.vector_store %arg4[%c0_16, %c1_17, %c0_18], %23 {strides = array<i32>} : memref<1x2x256xf32, #tpu.memory_space<vmem>>, vector<1x1x256xf32>,
    } else {
    }
    %c0_i32_6 = arith.constant 0 : i32
    %9 = arith.cmpi eq, %arg2, %c0_i32_6 : i32
    %10 = arith.extui %9 : i1 to i32
    %c0_i32_7 = arith.constant 0 : i32
    %11 = arith.cmpi ne, %10, %c0_i32_7 : i32
    scf.if %11 {
      %c0_8 = arith.constant 0 : index
      %c1 = arith.constant 1 : index
      %c0_9 = arith.constant 0 : index
      %12 = vector.load %arg4[%c0_8, %c1, %c0_9] : memref<1x2x256xf32, #tpu.memory_space<vmem>>, vector<1x1x256xf32>
      %13 = vector.shape_cast %12 : vector<1x1x256xf32> to vector<1x256xf32>
      %cst_10 = arith.constant 2.500000e-01 : f32
      %14 = vector.broadcast %cst_10 : f32 to vector<1x256xf32>
      %15 = arith.mulf %13, %14 : vector<1x256xf32>
      %c0_11 = arith.constant 0 : index
      %c1_12 = arith.constant 1 : index
      %c0_13 = arith.constant 0 : index
      %16 = vector.load %arg4[%c0_11, %c1_12, %c0_13] : memref<1x2x256xf32, #tpu.memory_space<vmem>>, vector<1x1x256xf32>
      %17 = vector.shape_cast %16 : vector<1x1x256xf32> to vector<1x256xf32>
      %18 = vector.shape_cast %15 : vector<1x256xf32> to vector<1x1x256xf32>
      tpu.vector_store %arg4[%c0_11, %c1_12, %c0_13], %18 {strides = array<i32>} : memref<1x2x256xf32, #tpu.memory_space<vmem>>, vector<1x1x256xf32>,
    } else {
    }
    return
  }
  func.func @transform_0(%arg0: i32, %arg1: i32, %arg2: i32) -> (i32, i32, i32) {
    %c0_i32 = arith.constant 0 : i32
    return %arg0, %arg2, %arg1 : i32, i32, i32
  }
  func.func @transform_1(%arg0: i32, %arg1: i32, %arg2: i32) -> (i32, i32, i32) {
    %c0_i32 = arith.constant 0 : i32
    %c0_i32_0 = arith.constant 0 : i32
    return %arg0, %c0_i32, %arg1 : i32, i32, i32
  }
}

</mosaic_0001>

<llo_original>
// kernel: tpu_custom_call.1
$region0: #{tpu_custom_call.1}
  #allocation0 [shape = 'u32[]', space=smem, size = 0x4, offset = 0x4, fixed_abs, tag = 'smem constant byte address 0x4 - core index']
  #allocation1 [shape = 'u32[144,128]{1,0:T(1,128)}', space=vmem, size = 0x12000, scoped, tag = 'internal scratch']
  %s0 = inlined_call_operand.hbm [shape: f32[2,4,256], index: 0, kind: input, shape index: {}]
  %s1 = inlined_call_operand.hbm [shape: f32[2,2,256], index: 1, kind: output, shape index: {}]
  %s2 = sld [smem:[#allocation0]]
  $region53: #{tpu_custom_call.1} parent=0
    _
  %s4 = ssub.s32 1, %s2
  %s5 = scalar_select 0, %s4, %s2
  $region1: #{tpu_custom_call.1} parent=0
    #allocation2 [shape = 'u8[8192]{0}', space=vmem, size = 0x2000, scoped, tag = 'input window, operand 0']
    #allocation3 [shape = 's32[2]{0}', space=sflag, size = 0x8, scoped, tag = 'scoped memory for tpu_custom_call.1']
    #allocation4 [shape = 's32[2]{0}', space=sflag, size = 0x8, scoped, tag = 'scoped memory for tpu_custom_call.1']
    #allocation5 [shape = 'u8[4096]{0}', space=vmem, size = 0x1000, scoped, tag = 'output window, operand 0']
    %6 = vsyncpa [#allocation3], 0
    %s7 = scalar_lea.sflag [#allocation3], 1
    %8 = vsyncpa %s7, 0
    %9 = vsyncpa [#allocation4], 0
    %s10 = scalar_lea.sflag [#allocation4], 1
    %11 = vsyncpa %s10, 0
    loop: start=0, step=1, limit=4
    $region2: #{tpu_custom_call.1} parent=1 // loop_pre_header
      _
    $region3: #{tpu_custom_call.1} parent=1 // loop_header
      %s13 = sphi 0, %s17
      %p14 = scmp.ge.s32.totalorder %s13, 4
      %s20 = sphi 0, %s39
      %s21 = sphi 0, %s35
      %s22 = sphi 0, %s31
      %s23 = sphi 0, %s20
      %s24 = sphi 0, %s21
      %s25 = sphi 0, %s22
      %s26 = sphi 0, %s23
      %s27 = sphi 0, %s24
      %s28 = sphi 0, %s25
      %s46 = sphi 0, %s48
      %s49 = sphi 0, %s46
      %s50 = sphi 0, %s49
      %s66 = sphi 0, %s50
      %s74 = sphi 0, %s76
      %s77 = sphi 0, %s74
      %s78 = sphi 0, %s77
      %s94 = sphi 0, %s78
    $region4: #{tpu_custom_call.1} parent=1 // loop_header_branch
      %16 = sbr.rel (%p14) target = $region8
    $region5: #{tpu_custom_call.1} parent=1 // loop_body
      %s18 = ssub.s32 %s13, 1
      %s19 = ssub.s32 %s13, 2
      %s29 = sadd.s32 1, %s22
      %p30 = scmp.ge.s32.totalorder %s29, 1
      %s31 = scalar_select %p30, 0, %s29
      %s32 = sadd.s32 1, %s21
      %s33 = scalar_select %p30, %s32, %s21
      %p34 = scmp.ge.s32.totalorder %s33, 1
      %s35 = scalar_select %p34, 0, %s33
      %s36 = sadd.s32 1, %s20
      %s37 = scalar_select %p34, %s36, %s20
      %p38 = scmp.ge.s32.totalorder %s37, 2
      %s39 = scalar_select %p38, 0, %s37
      %s40 = ssub.s32 %s20, %s39
      %s41 = ssub.s32 %s22, %s31
      %s42 = sor.u32 %s40, %s41
      %s43 = ssub.s32 %s21, %s35
      %s44 = sor.u32 %s42, %s43
      %p45 = scmp.eq.s32.totalorder %s44, 0
      %s47 = sadd.s32 %s46, 1
      %s48 = scalar_select %p45, %s46, %s47
      %p51 = pneg %p45
      %p52 = scmp.eq.s32.totalorder %s13, 1
      %p53 = por %p51, %p52
      %p54 = scmp.ne.s32.totalorder %s46, %s49
      %p55 = scmp.eq.s32.totalorder %s13, 0
      %p56 = por %p54, %p55
      %p57 = scmp.ne.s32.totalorder %s46, %s49
      %p58 = scmp.eq.s32.totalorder %s18, 1
      %p59 = por %p57, %p58
      %p60 = scmp.ne.s32.totalorder %s49, %s50
      %p61 = scmp.eq.s32.totalorder %s18, 0
      %p62 = por %p60, %p61
      %p63 = scmp.ne.s32.totalorder %s49, %s50
      %p64 = scmp.eq.s32.totalorder %s19, 1
      %p65 = por %p63, %p64
      %p67 = scmp.ne.s32.totalorder %s50, %s66
      %p68 = scmp.eq.s32.totalorder %s19, 0
      %p69 = por %p67, %p68
      %s70 = ssub.s32 %s20, %s39
      %s71 = ssub.s32 %s21, %s35
      %s72 = sor.u32 %s70, %s71
      %p73 = scmp.eq.s32.totalorder %s72, 0
      %s75 = sadd.s32 %s74, 1
      %s76 = scalar_select %p73, %s74, %s75
      %p79 = pneg %p73
      %p80 = scmp.eq.s32.totalorder %s13, 1
      %p81 = por %p79, %p80
      %p82 = scmp.ne.s32.totalorder %s74, %s77
      %p83 = scmp.eq.s32.totalorder %s13, 0
      %p84 = por %p82, %p83
      %p85 = scmp.ne.s32.totalorder %s74, %s77
      %p86 = scmp.eq.s32.totalorder %s18, 1
      %p87 = por %p85, %p86
      %p88 = scmp.ne.s32.totalorder %s77, %s78
      %p89 = scmp.eq.s32.totalorder %s18, 0
      %p90 = por %p88, %p89
      %p91 = scmp.ne.s32.totalorder %s77, %s78
      %p92 = scmp.eq.s32.totalorder %s19, 1
      %p93 = por %p91, %p92
      %p95 = scmp.ne.s32.totalorder %s78, %s94
      %p96 = scmp.eq.s32.totalorder %s19, 0
      %p97 = por %p95, %p96
      %p98 = scmp.le.s32.totalorder 1, %s13
      %p99 = scmp.lt.s32.totalorder %s13, 3
      %p100 = pnand %p98, %p99
      %p101 = pneg %p100
      // Predicated region
      $region9: #{tpu_custom_call.1} parent=5 // pred_check
        _
      $region10: #{tpu_custom_call.1} parent=5 // pred_check_branch
        %103 = sbr.rel (%p100) target = $region12
      $region11: #{tpu_custom_call.1} parent=5 // pred_region
        %s104 = ssub.s32 %s13, 1
      $region12: #{tpu_custom_call.1} parent=5 // pred_fallthru
        _
      %p105 = scmp.lt.s32.totalorder %s13, 2
      // Predicated region
      $region13: #{tpu_custom_call.1} parent=5 // pred_check
        %p106 = pneg %p105
      $region14: #{tpu_custom_call.1} parent=5 // pred_check_branch
        %108 = sbr.rel (%p106) target = $region16
      $region15: #{tpu_custom_call.1} parent=5 // pred_region
        // Predicated region
        $region17: #{tpu_custom_call.1} parent=15 // pred_check
          %p109 = pneg %p56
        $region18: #{tpu_custom_call.1} parent=15 // pred_check_branch
          %111 = sbr.rel (%p109) target = $region20
        $region19: #{tpu_custom_call.1} parent=15 // pred_region
          %s112 = sand.u32 %s46, 1
          %s113 = scalar_lea.sflag [#allocation3], %s112
          %s114 = sand.u32 %s46, 1
          %s115 = smul.addr %s114, 8
          %s116 = scalar_lea.vmem [#allocation2], %s115
          %s117 = smul.u32 2, %s21
          %s119 = ssub.s32 128, 128
          %120 = vsyncadd %s113, %s119
          %s121 = smul.addr %s22, 2
          %s122 = sadd.s32 %s117, %s121
          %s123 = smul.addr %s20, 2
          %s124 = sadd.s32 %s122, %s123
          %s125 = smul.addr %s124, 64
          %s126 = scalar_lea.hbm %s0, %s125
          %s128 = sshll.u32 %s116, 4
          %s129 = int_to_ptr.vmem [resolvable:$true] %s128
          %131 = dma.hbm_to_vmem [thread:$0]  %s126, 128, %s129, %s113
        $region20: #{tpu_custom_call.1} parent=15 // pred_fallthru
          _
      $region16: #{tpu_custom_call.1} parent=5 // pred_fallthru
        _
      %p132 = scmp.le.s32.totalorder 1, %s13
      %p133 = scmp.lt.s32.totalorder %s13, 3
      %p134 = pnand %p132, %p133
      %p135 = pneg %p134
      // Predicated region
      $region21: #{tpu_custom_call.1} parent=5 // pred_check
        _
      $region22: #{tpu_custom_call.1} parent=5 // pred_check_branch
        %137 = sbr.rel (%p134) target = $region24
      $region23: #{tpu_custom_call.1} parent=5 // pred_region
        %s138 = ssub.s32 %s13, 1
        %s139 = sand.u32 %s49, 1
        %s140 = scalar_lea.sflag [#allocation3], %s139
        %s141 = sand.u32 %s49, 1
        %s142 = smul.addr %s141, 8
        %s143 = scalar_lea.vmem [#allocation2], %s142
        // Predicated region
        $region25: #{tpu_custom_call.1} parent=23 // pred_check
          %p144 = pneg %p62
        $region26: #{tpu_custom_call.1} parent=23 // pred_check_branch
          %146 = sbr.rel (%p144) target = $region28
        $region27: #{tpu_custom_call.1} parent=23 // pred_region
          %147 = dma.done %s140, 128
        $region28: #{tpu_custom_call.1} parent=23 // pred_fallthru
          _
        %s148 = sand.u32 %s49, 1
        %s149 = scalar_lea.sflag [#allocation3], %s148
        %s150 = sand.u32 %s49, 1
        %s151 = smul.addr %s150, 8
        %s152 = scalar_lea.vmem [#allocation2], %s151
        %p153 = pneg %p62
        %p154 = pneg %p59
        %p155 = pneg %p90
        %p156 = pneg %p87
        %s157 = sand.u32 %s77, 1
        %s158 = scalar_lea.sflag [#allocation4], %s157
        %s159 = sand.u32 %s77, 1
        %s160 = smul.addr %s159, 4
        %s161 = scalar_lea.vmem [#allocation5], %s160
        %s162 = smul.u32 2, %s24
        %s163 = smul.u32 2, %s24
        %v164 = vld [vmem:[%s143] sm:$0xff]
        %v166 = vcombine.high %v164, %v164
        %vm168 = vcmask 1043456
        %v169 = vsel %vm168, %v164, -inf
        %v170 = vrot.slane %v169, 4
        %v171 = vmax.f32 %v169, %v170
        %v172 = vrot.slane %v171, 2
        %v173 = vmax.f32 %v171, %v172
        %v174 = vrot.slane %v173, 1
        %v175 = vmax.f32 %v173, %v174
        %v176 = vsel %vm168, %v166, -inf
        %v177 = vrot.slane %v176, 4
        %v178 = vmax.f32 %v176, %v177
        %v179 = vrot.slane %v178, 2
        %v180 = vmax.f32 %v178, %v179
        %v181 = vrot.slane %v180, 1
        %v182 = vmax.f32 %v180, %v181
        %v183 = vsel %vm168, %v164, 0.0
        %v184 = vrot.slane %v183, 4
        %v185 = vadd.f32 %v183, %v184
        %v186 = vrot.slane %v185, 2
        %v187 = vadd.f32 %v185, %v186
        %v188 = vrot.slane %v187, 1
        %v189 = vadd.f32 %v187, %v188
        %v190 = vsel %vm168, %v166, 0.0
        %v191 = vrot.slane %v190, 4
        %v192 = vadd.f32 %v190, %v191
        %v193 = vrot.slane %v192, 2
        %v194 = vadd.f32 %v192, %v193
        %v195 = vrot.slane %v194, 1
        %v196 = vadd.f32 %v194, %v195
        %p197 = scmp.eq.s32.totalorder %s25, 0
        // Predicated region
        $region29: #{tpu_custom_call.1} parent=23 // pred_check
          %p198 = pneg %p197
        $region30: #{tpu_custom_call.1} parent=23 // pred_check_branch
          %200 = sbr.rel (%p198) target = $region32
        $region31: #{tpu_custom_call.1} parent=23 // pred_region
          %v203 = vcombine.low %v175, %v182
          %v205 = vunpack.c.l.s4 1966171168
          %v206 = vunpack.c.0.s8 %v205
          %v207 = vlaneseq
          %v208 = vshrl.u32 %v207, 7
          %v209 = vsub.s32 %v206, %v208
          %v210 = vrot.slane %v203, %v209
          %v212 = vunpack.c.l.s4 1966171168
          %v213 = vunpack.c.0.s8 %v212
          %v214 = vlaneseq
          %v215 = vshrl.u32 %v214, 7
          %v216 = vsub.s32 %v213, %v215
          %v217 = vrot.slane %v210, %v216
          %v219 = vlaneseq
          %vm220 = vcmp.ge.s32.totalorder %v219, 0
          %vm221 = vcmp.lt.s32.totalorder %v219, 256
          %vm222 = vmand %vm220, %vm221
          %223 = vst.msk [vmem:[%s161] ss:$2 sm:$0x3] %vm222, %v217
          %v226 = vcombine.low %v189, %v196
          %v228 = vunpack.c.l.s4 1966171168
          %v229 = vunpack.c.0.s8 %v228
          %v230 = vlaneseq
          %v231 = vshrl.u32 %v230, 7
          %v232 = vsub.s32 %v229, %v231
          %v233 = vrot.slane %v226, %v232
          %v235 = vunpack.c.l.s4 1966171168
          %v236 = vunpack.c.0.s8 %v235
          %v237 = vlaneseq
          %v238 = vshrl.u32 %v237, 7
          %v239 = vsub.s32 %v236, %v238
          %v240 = vrot.slane %v233, %v239
          %s242 = scalar_lea.vmem %s161, 1 [#allocation5]
          %243 = vst.msk [vmem:[%s242] ss:$2 sm:$0x3] %vm222, %v240
        $region32: #{tpu_custom_call.1} parent=23 // pred_fallthru
          _
        %p244 = scmp.gt.s32.totalorder %s25, 0
        // Predicated region
        $region33: #{tpu_custom_call.1} parent=23 // pred_check
          %p245 = pneg %p244
        $region34: #{tpu_custom_call.1} parent=23 // pred_check_branch
          %247 = sbr.rel (%p245) target = $region36
        $region35: #{tpu_custom_call.1} parent=23 // pred_region
          %v248 = vld [vmem:[%s161] ss:$2 sm:$0x3]
          %v251 = vcombine.low %v175, %v182
          %v253 = vunpack.c.l.s4 1966171168
          %v254 = vunpack.c.0.s8 %v253
          %v255 = vlaneseq
          %v256 = vshrl.u32 %v255, 7
          %v257 = vsub.s32 %v254, %v256
          %v258 = vrot.slane %v251, %v257
          %v260 = vunpack.c.l.s4 1966171168
          %v261 = vunpack.c.0.s8 %v260
          %v262 = vlaneseq
          %v263 = vshrl.u32 %v262, 7
          %v264 = vsub.s32 %v261, %v263
          %v265 = vrot.slane %v258, %v264
          %v267 = vmax.f32 %v248, %v265
          %v268 = vlaneseq
          %vm269 = vcmp.ge.s32.totalorder %v268, 0
          %vm270 = vcmp.lt.s32.totalorder %v268, 256
          %vm271 = vmand %vm269, %vm270
          %272 = vst.msk [vmem:[%s161] ss:$2 sm:$0x3] %vm271, %v267
          %s273 = scalar_lea.vmem %s161, 1 [#allocation5]
          %v274 = vld [vmem:[%s273] ss:$2 sm:$0x3]
          %v277 = vcombine.low %v189, %v196
          %v279 = vunpack.c.l.s4 1966171168
          %v280 = vunpack.c.0.s8 %v279
          %v281 = vlaneseq
          %v282 = vshrl.u32 %v281, 7
          %v283 = vsub.s32 %v280, %v282
          %v284 = vrot.slane %v277, %v283
          %v286 = vunpack.c.l.s4 1966171168
          %v287 = vunpack.c.0.s8 %v286
          %v288 = vlaneseq
          %v289 = vshrl.u32 %v288, 7
          %v290 = vsub.s32 %v287, %v289
          %v291 = vrot.slane %v284, %v290
          %v293 = vadd.f32 %v274, %v291
          %294 = vst.msk [vmem:[%s273] ss:$2 sm:$0x3] %vm271, %v293
        $region36: #{tpu_custom_call.1} parent=23 // pred_fallthru
          _
        // Predicated region
        $region37: #{tpu_custom_call.1} parent=23 // pred_check
          %p295 = pneg %p197
        $region38: #{tpu_custom_call.1} parent=23 // pred_check_branch
          %297 = sbr.rel (%p295) target = $region40
        $region39: #{tpu_custom_call.1} parent=23 // pred_region
          %s298 = scalar_lea.vmem %s161, 1 [#allocation5]
          %v299 = vld [vmem:[%s298] ss:$2 sm:$0x3]
          %v300 = vmul.f32 %v299, 0.25
          %v301 = vlaneseq
          %vm302 = vcmp.ge.s32.totalorder %v301, 0
          %vm303 = vcmp.lt.s32.totalorder %v301, 256
          %vm304 = vmand %vm302, %vm303
          %305 = vst.msk [vmem:[%s298] ss:$2 sm:$0x3] %vm304, %v300
        $region40: #{tpu_custom_call.1} parent=23 // pred_fallthru
          _
        %s306 = sand.u32 %s77, 1
        %s307 = scalar_lea.sflag [#allocation4], %s306
        %s308 = sand.u32 %s77, 1
        %s309 = smul.addr %s308, 4
        %s310 = scalar_lea.vmem [#allocation5], %s309
        // Predicated region
        $region41: #{tpu_custom_call.1} parent=23 // pred_check
          %p311 = pneg %p87
        $region42: #{tpu_custom_call.1} parent=23 // pred_check_branch
          %313 = sbr.rel (%p311) target = $region44
        $region43: #{tpu_custom_call.1} parent=23 // pred_region
          %s314 = smul.u32 2, %s24
          %s316 = ssub.s32 64, 64
          %317 = vsyncadd %s307, %s316
          %s318 = smul.addr %s23, 2
          %s319 = sadd.s32 %s314, %s318
          %s320 = smul.addr %s319, 32
          %s321 = scalar_lea.hbm %s1, %s320
          %s323 = sshll.u32 %s310, 4
          %s324 = int_to_ptr.vmem [resolvable:$true] %s323
          %326 = dma.vmem_to_hbm [thread:$0]  %s324, 64, %s321, %s307
        $region44: #{tpu_custom_call.1} parent=23 // pred_fallthru
          _
      $region24: #{tpu_custom_call.1} parent=5 // pred_fallthru
        _
      %p327 = scmp.le.s32.totalorder 2, %s13
      // Predicated region
      $region45: #{tpu_custom_call.1} parent=5 // pred_check
        %p328 = pneg %p327
      $region46: #{tpu_custom_call.1} parent=5 // pred_check_branch
        %330 = sbr.rel (%p328) target = $region48
      $region47: #{tpu_custom_call.1} parent=5 // pred_region
        %s331 = ssub.s32 %s13, 2
        // Predicated region
        $region49: #{tpu_custom_call.1} parent=47 // pred_check
          %p332 = pneg %p93
        $region50: #{tpu_custom_call.1} parent=47 // pred_check_branch
          %334 = sbr.rel (%p332) target = $region52
        $region51: #{tpu_custom_call.1} parent=47 // pred_region
          %s335 = sand.u32 %s78, 1
          %s336 = scalar_lea.sflag [#allocation4], %s335
          %s337 = sand.u32 %s78, 1
          %s338 = smul.addr %s337, 4
          %s339 = scalar_lea.vmem [#allocation5], %s338
          %340 = dma.done %s336, 64
        $region52: #{tpu_custom_call.1} parent=47 // pred_fallthru
          _
      $region48: #{tpu_custom_call.1} parent=5 // pred_fallthru
        _
    $region6: #{tpu_custom_call.1} parent=1 // loop_footer
      %s17 = sadd.s32 1, %s13
    $region7: #{tpu_custom_call.1} parent=1 // loop_footer_branch
      %12 = sbr.rel target = $region3
    $region8: #{tpu_custom_call.1} parent=1 // loop_exit
      _
    %341 = vsyncpa [#allocation3], 1
    %s342 = scalar_lea.sflag [#allocation3], 1
    %343 = vsyncpa %s342, 1
    %344 = vsyncpa [#allocation4], 1
    %s345 = scalar_lea.sflag [#allocation4], 1
    %346 = vsyncpa %s345, 1

</llo_original>
